<compile_context>
chip_gen: v7x
topology: tpu7x:2x2x1
jax: 0.10.0
libtpu: 0.0.40
codegen_flags: <defaults>
</compile_context>

<pallas_src>
import functools

import jax
import jax.numpy as jnp
from jax.experimental import pallas as pl
from jax.experimental.pallas import tpu as pltpu


def _round_up(x, m):
    return (x + m - 1) // m * m


def _vmem_capacity_bytes():
    try:
        return int(pltpu.get_tpu_info().vmem_capacity_bytes)
    except Exception:
        return 64 * 1024 * 1024  # conservative fallback (v7x per-TC VMEM)


def _choose_tiles(n, cout_p, vmem_bytes):
    """Pick (tm, tn, n_pad) so the per-step working set fits comfortably.

    Per-step VMEM ~ double-buffered bf16 adj tile + resident f32 h
    (budgeted x2) + double-buffered f32 output tile + a few live f32 (TM, TN)
    temporaries + the accumulator scratch.
    """
    n128 = _round_up(n, 128)
    budget = int(0.5 * vmem_bytes)

    def step_bytes(tm, tn):
        return (2 * tm * tn * 2            # adj bf16 tile, double-buffered
                + 2 * n128 * cout_p * 4    # resident h (worst-case 2 buffers)
                + 2 * tm * cout_p * 4      # out tile, double-buffered
                + 5 * tm * tn * 4          # live f32 temporaries on the tile
                + tm * cout_p * 4 + 16 * tm)  # accumulator scratches

    for tn_target in (1024, 512, 256, 128):
        tn = min(tn_target, n128)
        for tm in (512, 256, 128):
            if tn % tm:            # tm must divide tn so both divide n_pad
                continue
            if step_bytes(tm, tn) <= budget:
                return tm, tn, _round_up(n, tn)
    return 128, 128, n128


# ---------------- Kernel 1: linear layer + attention projections ----------------
def _linear_kernel(x_ref, w_ref, b_ref, v01_ref, h_ref, f_ref):
    # h = x @ W^T + b   (MXU, f32 accumulate)
    h = jnp.dot(x_ref[...], w_ref[...], preferred_element_type=jnp.float32)
    h = h + b_ref[...]
    h_ref[...] = h
    # f[:, 0] = h @ v0, f[:, 1] = h @ v1  -- one skinny MXU matmul.
    f_ref[...] = jnp.dot(h, v01_ref[...], preferred_element_type=jnp.float32)


# ------------- Kernel 2: masked row-softmax attention + aggregation -------------
def _attn_kernel(adj_ref, f1_ref, f2_ref, h_ref, out_ref, l_sc, acc_sc,
                 *, inv_temp, tn):
    j = pl.program_id(1)

    @pl.when(j == 0)
    def _():
        l_sc[...] = jnp.zeros_like(l_sc)
        acc_sc[...] = jnp.zeros_like(acc_sc)

    adj = adj_ref[...].astype(jnp.float32)               # (TM, TN), bf16 -> f32
    logits = adj * (f1_ref[...] + f2_ref[...])           # (TM,1)+(1,TN) -> (TM,TN)

    # to_sparse(): entries where (sigmoid - 0.5) == 0 are dropped from the softmax.
    u = jax.nn.sigmoid(logits) - 0.5
    mask = u != 0.0
    # softmax is shift-invariant; shift by the static bound 0.5/temp so the exp
    # argument is always <= 0 (no overflow) without a running row-max pass.
    e = jnp.where(mask, jnp.exp((u - 0.5) * inv_temp), 0.0)

    l_sc[...] += jnp.sum(e, axis=1, keepdims=True)

    # Aggregate against the VMEM-resident h: slice out the TN rows matching
    # this column tile (128-aligned dynamic start).
    col0 = pl.multiple_of(j * tn, 128)
    h_cols = h_ref[pl.ds(col0, tn), :]
    acc_sc[...] += jnp.dot(e, h_cols, preferred_element_type=jnp.float32)

    @pl.when(j == pl.num_programs(1) - 1)
    def _():
        denom = l_sc[...]
        inv = pl.reciprocal(jnp.where(denom > 0.0, denom, 1.0), approx=True)
        out_ref[...] = (acc_sc[...] * inv).astype(out_ref.dtype)  # empty rows stay 0


def gat_single_head(node_feats, adj, w, b, v0, v1, temp=1.0, *, tm=None, tn=None):
    """w is W^T with shape (c_in, c_out); b (c_out,); v0/v1 (c_out, 1) or (c_out,)."""
    N, c_in = node_feats.shape
    c_out = w.shape[1]

    f32 = jnp.float32
    cin_p = _round_up(c_in, 128)
    cout_p = _round_up(c_out, 128)

    vmem_cap = _vmem_capacity_bytes()
    if tm is None and tn is None:
        tm, tn, _ = _choose_tiles(N, cout_p, vmem_cap)
    elif tm is None or tn is None:
        raise ValueError("override both tm and tn or neither")
    n_pad = _round_up(N, max(tm, tn))
    if n_pad % tm or n_pad % tn:
        raise ValueError("tile sizes must divide the padded graph size")

    # Zero-padded, lane-dense operands.  Padded rows/cols have adj == 0, so they
    # are masked out of the softmax and produce all-zero output rows (sliced off).
    x_p = jnp.zeros((n_pad, cin_p), f32).at[:N, :c_in].set(node_feats.astype(f32))
    adj_p = jnp.zeros((n_pad, n_pad), jnp.bfloat16).at[:N, :N].set(
        adj.astype(jnp.bfloat16))
    w_p = jnp.zeros((cin_p, cout_p), f32).at[:c_in, :c_out].set(w.astype(f32))
    b_p = jnp.zeros((1, cout_p), f32).at[0, :c_out].set(
        jnp.reshape(b, (-1,)).astype(f32))
    v01 = jnp.zeros((cout_p, 2), f32)
    v01 = v01.at[:c_out, 0].set(jnp.reshape(v0, (-1,)).astype(f32))
    v01 = v01.at[:c_out, 1].set(jnp.reshape(v1, (-1,)).astype(f32))

    vmem_limit = int(0.8 * vmem_cap)

    # ---- Kernel 1: h and the two attention projections (computed once) ----
    h, f12 = pl.pallas_call(
        _linear_kernel,
        grid=(n_pad // tm,),
        in_specs=[
            pl.BlockSpec((tm, cin_p), lambda i: (i, 0)),
            pl.BlockSpec((cin_p, cout_p), lambda i: (0, 0)),
            pl.BlockSpec((1, cout_p), lambda i: (0, 0)),
            pl.BlockSpec((cout_p, 2), lambda i: (0, 0)),
        ],
        out_specs=(
            pl.BlockSpec((tm, cout_p), lambda i: (i, 0)),
            pl.BlockSpec((tm, 2), lambda i: (i, 0)),
        ),
        out_shape=(
            jax.ShapeDtypeStruct((n_pad, cout_p), f32),
            jax.ShapeDtypeStruct((n_pad, 2), f32),
        ),
        compiler_params=pltpu.CompilerParams(
            dimension_semantics=("parallel",),
            vmem_limit_bytes=vmem_limit,
        ),
    )(x_p, w_p, b_p, v01)

    f1 = f12[:, 0:1]                       # (n_pad, 1)
    f2_row = f12[:, 1].reshape(1, n_pad)   # (1, n_pad) -- cheap layout plumbing

    # ---- Kernel 2: flash-style column-tiled masked softmax + aggregation ----
    out = pl.pallas_call(
        functools.partial(_attn_kernel, inv_temp=1.0 / float(temp), tn=tn),
        grid=(n_pad // tm, n_pad // tn),
        in_specs=[
            pl.BlockSpec((tm, tn), lambda i, j: (i, j)),          # adj tile (bf16)
            pl.BlockSpec((tm, 1), lambda i, j: (i, 0)),           # f1 row tile
            pl.BlockSpec((1, tn), lambda i, j: (0, j)),           # f2 col tile
            pl.BlockSpec((n_pad, cout_p), lambda i, j: (0, 0)),   # full h (resident)
        ],
        out_specs=pl.BlockSpec((tm, cout_p), lambda i, j: (i, 0)),
        out_shape=jax.ShapeDtypeStruct((n_pad, cout_p), f32),
        scratch_shapes=[
            pltpu.VMEM((tm, 1), f32),        # softmax denominator accumulator
            pltpu.VMEM((tm, cout_p), f32),   # output accumulator
        ],
        compiler_params=pltpu.CompilerParams(
            dimension_semantics=("parallel", "arbitrary"),
            vmem_limit_bytes=vmem_limit,
        ),
    )(adj_p, f1, f2_row, h)

    return out[:N, :c_out]


def gat_single_head_ref(node_feats, adj, w, b, v0, v1, temp=1.0):
    """Pure-JAX reference mirroring the PyTorch forward."""
    h = node_feats @ w + b.reshape(1, -1)
    f1 = h @ v0.reshape(-1, 1)
    f2 = h @ v1.reshape(-1, 1)
    logits = adj * (f1 + f2.T)
    u = jax.nn.sigmoid(logits) - 0.5
    mask = u != 0.0
    us = u / temp
    m = jnp.max(jnp.where(mask, us, -jnp.inf), axis=1, keepdims=True)
    m = jnp.where(jnp.isfinite(m), m, 0.0)
    e = jnp.where(mask, jnp.exp(us - m), 0.0)
    d = jnp.sum(e, axis=1, keepdims=True)
    p = e / jnp.where(d > 0, d, 1.0)
    return p @ h


if __name__ == "__main__":
    # Small but non-trivial shapes: exercises N/c_in/c_out padding plus (with the
    # forced-tile run) a multi-step column grid for the softmax accumulator.
    N, c_in, c_out = 384, 48, 32
    temp = 2.0

    key = jax.random.PRNGKey(0)
    k_x, k_adj, k_w, k_v0, k_v1 = jax.random.split(key, 5)

    # Parameter init matching the module's __init__ distributions (w = W^T).
    lim_w = jnp.sqrt(6.0 / (c_in + c_out))
    lim_v = jnp.sqrt(6.0 / (c_out + 1))
    w = jax.random.uniform(k_w, (c_in, c_out), jnp.float32, -lim_w, lim_w)
    b = jnp.zeros((c_out,), jnp.float32)
    v0 = jax.random.uniform(k_v0, (c_out, 1), jnp.float32, -lim_v, lim_v)
    v1 = jax.random.uniform(k_v1, (c_out, 1), jnp.float32, -lim_v, lim_v)

    # Node features and a 0/1 adjacency with self loops.
    node_feats = jax.random.normal(k_x, (N, c_in), jnp.float32)
    adj = (jax.random.uniform(k_adj, (N, N)) < 0.2).astype(jnp.float32)
    adj = jnp.maximum(adj, jnp.eye(N, dtype=jnp.float32))

    ref = gat_single_head_ref(node_feats, adj, w, b, v0, v1, temp)

    # Auto-tiled run (single column tile at this size).
    out = gat_single_head(node_feats, adj, w, b, v0, v1, temp)
    out = jax.block_until_ready(out)
    assert out.shape == (N, c_out)
    # Tolerance accounts for the EUP approximate reciprocal in the softmax denom.
    assert jnp.allclose(out, ref, atol=2e-3, rtol=2e-3), "mismatch vs reference"

    # Forced small tiles: exercises the multi-column-tile accumulator path.
    out2 = gat_single_head(node_feats, adj, w, b, v0, v1, temp, tm=128, tn=128)
    out2 = jax.block_until_ready(out2)
    assert jnp.allclose(out2, ref, atol=2e-3, rtol=2e-3), "mismatch (tiled path)"

    print("KERNEL_OK")
</pallas_src>

<mosaic_0001>
module attributes {stable_mosaic.version = 11 : i64} {
  func.func @_linear_kernel(%arg0: i32, %arg1: memref<128x128xf32, #tpu.memory_space<vmem>>, %arg2: memref<128x128xf32, #tpu.memory_space<vmem>>, %arg3: memref<1x128xf32, #tpu.memory_space<vmem>>, %arg4: memref<128x2xf32, #tpu.memory_space<vmem>>, %arg5: memref<128x128xf32, #tpu.memory_space<vmem>>, %arg6: memref<128x2xf32, #tpu.memory_space<vmem>>) attributes {dimension_semantics = [#tpu.dimension_semantics<parallel>], iteration_bounds = array<i64: 3>, scalar_prefetch = 0 : i64, scratch_operands = 0 : i64, tpu.core_type = #tpu.core_type<tc>, window_params = [{transform_indices = @transform_0, window_bounds = array<i64: 128, 128>}, {pipeline_mode = #tpu.pipeline_mode<synchronous>, transform_indices = @transform_1, window_bounds = array<i64: 128, 128>}, {pipeline_mode = #tpu.pipeline_mode<synchronous>, transform_indices = @transform_2, window_bounds = array<i64: 1, 128>}, {pipeline_mode = #tpu.pipeline_mode<synchronous>, transform_indices = @transform_3, window_bounds = array<i64: 128, 2>}, {transform_indices = @transform_4, window_bounds = array<i64: 128, 128>}, {transform_indices = @transform_5, window_bounds = array<i64: 128, 2>}]} {
    %c0 = arith.constant 0 : index
    %c0_0 = arith.constant 0 : index
    %0 = vector.load %arg1[%c0, %c0_0] : memref<128x128xf32, #tpu.memory_space<vmem>>, vector<128x128xf32>
    %c0_1 = arith.constant 0 : index
    %c0_2 = arith.constant 0 : index
    %1 = vector.load %arg2[%c0_1, %c0_2] : memref<128x128xf32, #tpu.memory_space<vmem>>, vector<128x128xf32>
    %cst = arith.constant dense<0.000000e+00> : vector<128x128xf32>
    %2 = tpu.matmul %0, %1, %cst {dimension_numbers = #tpu.dot_dimension_numbers<[1], [0], [0], [1], [0, 0, 1, 1], [], []>} : vector<128x128xf32>, vector<128x128xf32>, vector<128x128xf32> -> vector<128x128xf32>
    %c0_3 = arith.constant 0 : index
    %c0_4 = arith.constant 0 : index
    %3 = vector.load %arg3[%c0_3, %c0_4] : memref<1x128xf32, #tpu.memory_space<vmem>>, vector<1x128xf32>
    %4 = vector.broadcast %3 : vector<1x128xf32> to vector<128x128xf32>
    %5 = arith.addf %2, %4 : vector<128x128xf32>
    %c0_5 = arith.constant 0 : index
    %c0_6 = arith.constant 0 : index
    %6 = vector.load %arg5[%c0_5, %c0_6] : memref<128x128xf32, #tpu.memory_space<vmem>>, vector<128x128xf32>
    tpu.vector_store %arg5[%c0_5, %c0_6], %5 {strides = array<i32>} : memref<128x128xf32, #tpu.memory_space<vmem>>, vector<128x128xf32>,
    %c0_7 = arith.constant 0 : index
    %c0_8 = arith.constant 0 : index
    %7 = vector.load %arg4[%c0_7, %c0_8] : memref<128x2xf32, #tpu.memory_space<vmem>>, vector<128x2xf32>
    %cst_9 = arith.constant dense<0.000000e+00> : vector<128x2xf32>
    %8 = tpu.matmul %5, %7, %cst_9 {dimension_numbers = #tpu.dot_dimension_numbers<[1], [0], [0], [1], [0, 0, 1, 1], [], []>} : vector<128x128xf32>, vector<128x2xf32>, vector<128x2xf32> -> vector<128x2xf32>
    %c0_10 = arith.constant 0 : index
    %c0_11 = arith.constant 0 : index
    %9 = vector.load %arg6[%c0_10, %c0_11] : memref<128x2xf32, #tpu.memory_space<vmem>>, vector<128x2xf32>
    tpu.vector_store %arg6[%c0_10, %c0_11], %8 {strides = array<i32>} : memref<128x2xf32, #tpu.memory_space<vmem>>, vector<128x2xf32>,
    return
  }
  func.func @transform_0(%arg0: i32) -> (i32, i32) {
    %c0_i32 = arith.constant 0 : i32
    %c0_i32_0 = arith.constant 0 : i32
    return %arg0, %c0_i32 : i32, i32
  }
  func.func @transform_1(%arg0: i32) -> (i32, i32) {
    %c0_i32 = arith.constant 0 : i32
    %c0_i32_0 = arith.constant 0 : i32
    %c0_i32_1 = arith.constant 0 : i32
    return %c0_i32, %c0_i32_0 : i32, i32
  }
  func.func @transform_2(%arg0: i32) -> (i32, i32) {
    %c0_i32 = arith.constant 0 : i32
    %c0_i32_0 = arith.constant 0 : i32
    %c0_i32_1 = arith.constant 0 : i32
    return %c0_i32, %c0_i32_0 : i32, i32
  }
  func.func @transform_3(%arg0: i32) -> (i32, i32) {
    %c0_i32 = arith.constant 0 : i32
    %c0_i32_0 = arith.constant 0 : i32
    %c0_i32_1 = arith.constant 0 : i32
    return %c0_i32, %c0_i32_0 : i32, i32
  }
  func.func @transform_4(%arg0: i32) -> (i32, i32) {
    %c0_i32 = arith.constant 0 : i32
    %c0_i32_0 = arith.constant 0 : i32
    return %arg0, %c0_i32 : i32, i32
  }
  func.func @transform_5(%arg0: i32) -> (i32, i32) {
    %c0_i32 = arith.constant 0 : i32
    %c0_i32_0 = arith.constant 0 : i32
    return %arg0, %c0_i32 : i32, i32
  }
}

</mosaic_0001>

<llo_original>
// kernel: tpu_custom_call.1
$region0: #{tpu_custom_call.1}
  #allocation0 [shape = 'u32[]', space=smem, size = 0x4, offset = 0x4, fixed_abs, tag = 'smem constant byte address 0x4 - core index']
  #allocation1 [shape = 'u32[144,128]{1,0:T(1,128)}', space=vmem, size = 0x12000, scoped, tag = 'internal scratch']
  %s0 = inlined_call_operand.hbm [shape: f32[384,128], index: 0, kind: input, shape index: {}]
  %s1 = inlined_call_operand.vmem [shape: f32[128,128], index: 1, kind: input, shape index: {}]
  %s2 = inlined_call_operand.vmem [shape: f32[1,128], index: 2, kind: input, shape index: {}]
  %s3 = inlined_call_operand.vmem [shape: f32[128,2], index: 3, kind: input, shape index: {}]
  %s4 = inlined_call_operand.hbm [shape: f32[384,128], index: 4, kind: output, shape index: {0}]
  %s5 = inlined_call_operand.vmem [shape: f32[384,2], index: 5, kind: output, shape index: {1}]
  %6 = xla_tuple %s4, %s5
  %s7 = sld [smem:[#allocation0]]
  $region61: #{tpu_custom_call.1} parent=0
    _
  %s9 = ssub.s32 1, %s7
  %s10 = scalar_select 0, %s9, %s7
  $region1: #{tpu_custom_call.1} parent=0
    #allocation2 [shape = 'u8[131072]{0}', space=vmem, size = 0x20000, scoped, tag = 'input window, operand 0']
    #allocation3 [shape = 's32[2]{0}', space=sflag, size = 0x8, scoped, tag = 'scoped memory for tpu_custom_call.1']
    #allocation4 [shape = 's32[2]{0}', space=sflag, size = 0x8, scoped, tag = 'scoped memory for tpu_custom_call.1']
    #allocation5 [shape = 'u8[131072]{0}', space=vmem, size = 0x20000, scoped, tag = 'output window, operand 0']
    %11 = vsyncpa [#allocation3], 0
    %s12 = scalar_lea.sflag [#allocation3], 1
    %13 = vsyncpa %s12, 0
    %14 = vsyncpa [#allocation4], 0
    %s15 = scalar_lea.sflag [#allocation4], 1
    %16 = vsyncpa %s15, 0
    loop: start=0, step=1, limit=5
    $region2: #{tpu_custom_call.1} parent=1 // loop_pre_header
      _
    $region3: #{tpu_custom_call.1} parent=1 // loop_header
      %s18 = sphi 0, %s22
      %p19 = scmp.ge.s32.totalorder %s18, 5
      %s28 = sphi 0, %s30
      %s31 = sphi 0, %s28
      %s32 = sphi 0, %s31
      %s48 = sphi 0, %s32
      %s52 = sphi 0, %s52
      %s54 = sphi 0, %s52
      %s55 = sphi 0, %s54
      %s69 = sphi 0, %s55
      %s73 = sphi 0, %s73
      %s75 = sphi 0, %s73
      %s76 = sphi 0, %s75
      %s90 = sphi 0, %s76
      %s94 = sphi 0, %s94
      %s96 = sphi 0, %s94
      %s97 = sphi 0, %s96
      %s111 = sphi 0, %s97
      %s117 = sphi 0, %s119
      %s120 = sphi 0, %s117
      %s121 = sphi 0, %s120
      %s137 = sphi 0, %s121
      %s143 = sphi 0, %s145
      %s146 = sphi 0, %s143
      %s147 = sphi 0, %s146
      %s163 = sphi 0, %s147
    $region4: #{tpu_custom_call.1} parent=1 // loop_header_branch
      %21 = sbr.rel (%p19) target = $region8
    $region5: #{tpu_custom_call.1} parent=1 // loop_body
      %s23 = ssub.s32 %s18, 1
      %s24 = ssub.s32 %s18, 2
      %s25 = sadd.s32 %s18, 1
      %s26 = ssub.s32 %s18, %s25
      %p27 = scmp.eq.s32.totalorder %s26, 0
      %s29 = sadd.s32 %s28, 1
      %s30 = scalar_select %p27, %s28, %s29
      %p33 = pneg %p27
      %p34 = scmp.eq.s32.totalorder %s18, 2
      %p35 = por %p33, %p34
      %p36 = scmp.ne.s32.totalorder %s28, %s31
      %p37 = scmp.eq.s32.totalorder %s18, 0
      %p38 = por %p36, %p37
      %p39 = scmp.ne.s32.totalorder %s28, %s31
      %p40 = scmp.eq.s32.totalorder %s23, 2
      %p41 = por %p39, %p40
      %p42 = scmp.ne.s32.totalorder %s31, %s32
      %p43 = scmp.eq.s32.totalorder %s23, 0
      %p44 = por %p42, %p43
      %p45 = scmp.ne.s32.totalorder %s31, %s32
      %p46 = scmp.eq.s32.totalorder %s24, 2
      %p47 = por %p45, %p46
      %p49 = scmp.ne.s32.totalorder %s32, %s48
      %p50 = scmp.eq.s32.totalorder %s24, 0
      %p51 = por %p49, %p50
      %s53 = sadd.s32 %s52, 1
      %p56 = scmp.eq.s32.totalorder %s18, 2
      %p57 = scmp.ne.s32.totalorder %s52, %s54
      %p58 = scmp.eq.s32.totalorder %s18, 0
      %p59 = por %p57, %p58
      %p60 = scmp.ne.s32.totalorder %s52, %s54
      %p61 = scmp.eq.s32.totalorder %s23, 2
      %p62 = por %p60, %p61
      %p63 = scmp.ne.s32.totalorder %s54, %s55
      %p64 = scmp.eq.s32.totalorder %s23, 0
      %p65 = por %p63, %p64
      %p66 = scmp.ne.s32.totalorder %s54, %s55
      %p67 = scmp.eq.s32.totalorder %s24, 2
      %p68 = por %p66, %p67
      %p70 = scmp.ne.s32.totalorder %s55, %s69
      %p71 = scmp.eq.s32.totalorder %s24, 0
      %p72 = por %p70, %p71
      %s74 = sadd.s32 %s73, 1
      %p77 = scmp.eq.s32.totalorder %s18, 2
      %p78 = scmp.ne.s32.totalorder %s73, %s75
      %p79 = scmp.eq.s32.totalorder %s18, 0
      %p80 = por %p78, %p79
      %p81 = scmp.ne.s32.totalorder %s73, %s75
      %p82 = scmp.eq.s32.totalorder %s23, 2
      %p83 = por %p81, %p82
      %p84 = scmp.ne.s32.totalorder %s75, %s76
      %p85 = scmp.eq.s32.totalorder %s23, 0
      %p86 = por %p84, %p85
      %p87 = scmp.ne.s32.totalorder %s75, %s76
      %p88 = scmp.eq.s32.totalorder %s24, 2
      %p89 = por %p87, %p88
      %p91 = scmp.ne.s32.totalorder %s76, %s90
      %p92 = scmp.eq.s32.totalorder %s24, 0
      %p93 = por %p91, %p92
      %s95 = sadd.s32 %s94, 1
      %p98 = scmp.eq.s32.totalorder %s18, 2
      %p99 = scmp.ne.s32.totalorder %s94, %s96
      %p100 = scmp.eq.s32.totalorder %s18, 0
      %p101 = por %p99, %p100
      %p102 = scmp.ne.s32.totalorder %s94, %s96
      %p103 = scmp.eq.s32.totalorder %s23, 2
      %p104 = por %p102, %p103
      %p105 = scmp.ne.s32.totalorder %s96, %s97
      %p106 = scmp.eq.s32.totalorder %s23, 0
      %p107 = por %p105, %p106
      %p108 = scmp.ne.s32.totalorder %s96, %s97
      %p109 = scmp.eq.s32.totalorder %s24, 2
      %p110 = por %p108, %p109
      %p112 = scmp.ne.s32.totalorder %s97, %s111
      %p113 = scmp.eq.s32.totalorder %s24, 0
      %p114 = por %p112, %p113
      %s115 = ssub.s32 %s18, %s25
      %p116 = scmp.eq.s32.totalorder %s115, 0
      %s118 = sadd.s32 %s117, 1
      %s119 = scalar_select %p116, %s117, %s118
      %p122 = pneg %p116
      %p123 = scmp.eq.s32.totalorder %s18, 2
      %p124 = por %p122, %p123
      %p125 = scmp.ne.s32.totalorder %s117, %s120
      %p126 = scmp.eq.s32.totalorder %s18, 0
      %p127 = por %p125, %p126
      %p128 = scmp.ne.s32.totalorder %s117, %s120
      %p129 = scmp.eq.s32.totalorder %s23, 2
      %p130 = por %p128, %p129
      %p131 = scmp.ne.s32.totalorder %s120, %s121
      %p132 = scmp.eq.s32.totalorder %s23, 0
      %p133 = por %p131, %p132
      %p134 = scmp.ne.s32.totalorder %s120, %s121
      %p135 = scmp.eq.s32.totalorder %s24, 2
      %p136 = por %p134, %p135
      %p138 = scmp.ne.s32.totalorder %s121, %s137
      %p139 = scmp.eq.s32.totalorder %s24, 0
      %p140 = por %p138, %p139
      %s141 = ssub.s32 %s18, %s25
      %p142 = scmp.eq.s32.totalorder %s141, 0
      %s144 = sadd.s32 %s143, 1
      %s145 = scalar_select %p142, %s143, %s144
      %p148 = pneg %p142
      %p149 = scmp.eq.s32.totalorder %s18, 2
      %p150 = por %p148, %p149
      %p151 = scmp.ne.s32.totalorder %s143, %s146
      %p152 = scmp.eq.s32.totalorder %s18, 0
      %p153 = por %p151, %p152
      %p154 = scmp.ne.s32.totalorder %s143, %s146
      %p155 = scmp.eq.s32.totalorder %s23, 2
      %p156 = por %p154, %p155
      %p157 = scmp.ne.s32.totalorder %s146, %s147
      %p158 = scmp.eq.s32.totalorder %s23, 0
      %p159 = por %p157, %p158
      %p160 = scmp.ne.s32.totalorder %s146, %s147
      %p161 = scmp.eq.s32.totalorder %s24, 2
      %p162 = por %p160, %p161
      %p164 = scmp.ne.s32.totalorder %s147, %s163
      %p165 = scmp.eq.s32.totalorder %s24, 0
      %p166 = por %p164, %p165
      %p167 = scmp.le.s32.totalorder 1, %s18
      %p168 = scmp.lt.s32.totalorder %s18, 4
      %p169 = pnand %p167, %p168
      %p170 = pneg %p169
      // Predicated region
      $region9: #{tpu_custom_call.1} parent=5 // pred_check
        _
      $region10: #{tpu_custom_call.1} parent=5 // pred_check_branch
        %172 = sbr.rel (%p169) target = $region12
      $region11: #{tpu_custom_call.1} parent=5 // pred_region
        %s173 = ssub.s32 %s18, 1
        // Predicated region
        $region13: #{tpu_custom_call.1} parent=11 // pred_check
          %p174 = pneg %p65
        $region14: #{tpu_custom_call.1} parent=11 // pred_check_branch
          %176 = sbr.rel (%p174) target = $region16
        $region15: #{tpu_custom_call.1} parent=11 // pred_region
          _
        $region16: #{tpu_custom_call.1} parent=11 // pred_fallthru
          _
        // Predicated region
        $region17: #{tpu_custom_call.1} parent=11 // pred_check
          %p177 = pneg %p86
        $region18: #{tpu_custom_call.1} parent=11 // pred_check_branch
          %179 = sbr.rel (%p177) target = $region20
        $region19: #{tpu_custom_call.1} parent=11 // pred_region
          _
        $region20: #{tpu_custom_call.1} parent=11 // pred_fallthru
          _
        // Predicated region
        $region21: #{tpu_custom_call.1} parent=11 // pred_check
          %p180 = pneg %p107
        $region22: #{tpu_custom_call.1} parent=11 // pred_check_branch
          %182 = sbr.rel (%p180) target = $region24
        $region23: #{tpu_custom_call.1} parent=11 // pred_region
          _
        $region24: #{tpu_custom_call.1} parent=11 // pred_fallthru
          _
      $region12: #{tpu_custom_call.1} parent=5 // pred_fallthru
        _
      %p183 = scmp.lt.s32.totalorder %s18, 3
      // Predicated region
      $region25: #{tpu_custom_call.1} parent=5 // pred_check
        %p184 = pneg %p183
      $region26: #{tpu_custom_call.1} parent=5 // pred_check_branch
        %186 = sbr.rel (%p184) target = $region28
      $region27: #{tpu_custom_call.1} parent=5 // pred_region
        // Predicated region
        $region29: #{tpu_custom_call.1} parent=27 // pred_check
          %p187 = pneg %p38
        $region30: #{tpu_custom_call.1} parent=27 // pred_check_branch
          %189 = sbr.rel (%p187) target = $region32
        $region31: #{tpu_custom_call.1} parent=27 // pred_region
          %s190 = sand.u32 %s28, 1
          %s191 = scalar_lea.sflag [#allocation3], %s190
          %s192 = sand.u32 %s28, 1
          %s193 = smul.addr %s192, 128
          %s194 = scalar_lea.vmem [#allocation2], %s193
          %s195 = smul.u32 16, %s18
          %s197 = ssub.s32 2048, 2048
          %198 = vsyncadd %s191, %s197
          %s199 = smul.addr %s195, 128
          %s200 = scalar_lea.hbm %s0, %s199
          %s201 = sshll.u32 %s194, 4
          %s202 = int_to_ptr.vmem [resolvable:$true] %s201
          %207 = dma.hbm_to_vmem [thread:$0]  %s200, 2048, %s202, %s191, 128, 128, 8
        $region32: #{tpu_custom_call.1} parent=27 // pred_fallthru
          _
      $region28: #{tpu_custom_call.1} parent=5 // pred_fallthru
        _
      %p208 = scmp.le.s32.totalorder 1, %s18
      %p209 = scmp.lt.s32.totalorder %s18, 4
      %p210 = pnand %p208, %p209
      %p211 = pneg %p210
      // Predicated region
      $region33: #{tpu_custom_call.1} parent=5 // pred_check
        _
      $region34: #{tpu_custom_call.1} parent=5 // pred_check_branch
        %213 = sbr.rel (%p210) target = $region36
      $region35: #{tpu_custom_call.1} parent=5 // pred_region
        %s214 = ssub.s32 %s18, 1
        %s215 = sand.u32 %s31, 1
        %s216 = scalar_lea.sflag [#allocation3], %s215
        %s217 = sand.u32 %s31, 1
        %s218 = smul.addr %s217, 128
        %s219 = scalar_lea.vmem [#allocation2], %s218
        // Predicated region
        $region37: #{tpu_custom_call.1} parent=35 // pred_check
          %p220 = pneg %p44
        $region38: #{tpu_custom_call.1} parent=35 // pred_check_branch
          %222 = sbr.rel (%p220) target = $region40
        $region39: #{tpu_custom_call.1} parent=35 // pred_region
          %223 = dma.done %s216, 2048
        $region40: #{tpu_custom_call.1} parent=35 // pred_fallthru
          _
        %s224 = sand.u32 %s31, 1
        %s225 = scalar_lea.sflag [#allocation3], %s224
        %s226 = sand.u32 %s31, 1
        %s227 = smul.addr %s226, 128
        %s228 = scalar_lea.vmem [#allocation2], %s227
        %p229 = pneg %p44
        %p230 = pneg %p41
        %p231 = pneg %p65
        %p232 = pneg %p62
        %p233 = pneg %p86
        %p234 = pneg %p83
        %p235 = pneg %p107
        %p236 = pneg %p104
        %p237 = pneg %p133
        %p238 = pneg %p130
        %s239 = sand.u32 %s120, 1
        %s240 = scalar_lea.sflag [#allocation4], %s239
        %s241 = sand.u32 %s120, 1
        %s242 = smul.addr %s241, 128
        %s243 = scalar_lea.vmem [#allocation5], %s242
        %p244 = pneg %p159
        %p245 = pneg %p156
        %s246 = smul.u32 16, %s23
        %p247 = scmp.lt.s32.totalorder %s246, 47
        %s248 = scalar_select %p247, %s246, 47
        %s249 = smul.addr %s248, 8
        %s250 = scalar_lea.vmem %s5, %s249
        %s251 = smul.u32 16, %s23
        %s252 = smul.u32 16, %s23
        %s253 = smul.u32 16, %s23
        %p254 = scmp.lt.s32.totalorder %s253, 47
        %s255 = scalar_select %p254, %s253, 47
        %s256 = smul.addr %s255, 8
        %s257 = scalar_lea.vmem %s5, %s256
        %s258 = smul.u32 16, %s23
        %v259 = vld [vmem:[%s219] sm:$0xff]
        %v260 = vld [vmem:[%s219 + $0x8] sm:$0xff]
        %v261 = vld [vmem:[%s219 + $0x10] sm:$0xff]
        %v262 = vld [vmem:[%s219 + $0x18] sm:$0xff]
        %v263 = vld [vmem:[%s219 + $0x20] sm:$0xff]
        %v264 = vld [vmem:[%s219 + $0x28] sm:$0xff]
        %v265 = vld [vmem:[%s219 + $0x30] sm:$0xff]
        %v266 = vld [vmem:[%s219 + $0x38] sm:$0xff]
        %v267 = vld [vmem:[%s219 + $0x40] sm:$0xff]
        %v268 = vld [vmem:[%s219 + $0x48] sm:$0xff]
        %v269 = vld [vmem:[%s219 + $0x50] sm:$0xff]
        %v270 = vld [vmem:[%s219 + $0x58] sm:$0xff]
        %v271 = vld [vmem:[%s219 + $0x60] sm:$0xff]
        %v272 = vld [vmem:[%s219 + $0x68] sm:$0xff]
        %v273 = vld [vmem:[%s219 + $0x70] sm:$0xff]
        %v274 = vld [vmem:[%s219 + $0x78] sm:$0xff]
        %v275 = vld [vmem:[%s1] sm:$0xff]
        %v276 = vld [vmem:[%s1 + $0x8] sm:$0xff]
        %v277 = vld [vmem:[%s1 + $0x10] sm:$0xff]
        %v278 = vld [vmem:[%s1 + $0x18] sm:$0xff]
        %v279 = vld [vmem:[%s1 + $0x20] sm:$0xff]
        %v280 = vld [vmem:[%s1 + $0x28] sm:$0xff]
        %v281 = vld [vmem:[%s1 + $0x30] sm:$0xff]
        %v282 = vld [vmem:[%s1 + $0x38] sm:$0xff]
        %v283 = vld [vmem:[%s1 + $0x40] sm:$0xff]
        %v284 = vld [vmem:[%s1 + $0x48] sm:$0xff]
        %v285 = vld [vmem:[%s1 + $0x50] sm:$0xff]
        %v286 = vld [vmem:[%s1 + $0x58] sm:$0xff]
        %v287 = vld [vmem:[%s1 + $0x60] sm:$0xff]
        %v288 = vld [vmem:[%s1 + $0x68] sm:$0xff]
        %v289 = vld [vmem:[%s1 + $0x70] sm:$0xff]
        %v290 = vld [vmem:[%s1 + $0x78] sm:$0xff]
        %v291 = vld [vmem:[%s2] sm:$0x1]
        %v293 = vlaneseq
        %v294 = vshrl.u32 %v293, 7
        %v295 = vsub.s32 0, %v294
        %v296 = vrot.slane %v291, %v295
        %298 = vmatprep.subr.mxu0 0.0
        %299 = vmatpush1.msra.mxu0 %v275
        %300 = vmatprep.subr.mxu0 0.0
        %301 = vmatpush1.msra.mxu0 %v276
        %302 = vmatprep.subr.mxu0 0.0
        %303 = vmatpush1.msra.mxu0 %v277
        %304 = vmatprep.subr.mxu0 0.0
        %305 = vmatpush1.msra.mxu0 %v278
        %306 = vmatprep.subr.mxu0 0.0
        %307 = vmatpush1.msra.mxu0 %v279
        %308 = vmatprep.subr.mxu0 0.0
        %309 = vmatpush1.msra.mxu0 %v280
        %310 = vmatprep.subr.mxu0 0.0
        %311 = vmatpush1.msra.mxu0 %v281
        %312 = vmatprep.subr.mxu0 0.0
        %313 = vmatpush1.msra.mxu0 %v282
        %314 = vmatprep.subr.mxu0 0.0
        %315 = vmatpush1.msra.mxu0 %v283
        %316 = vmatprep.subr.mxu0 0.0
        %317 = vmatpush1.msra.mxu0 %v284
        %318 = vmatprep.subr.mxu0 0.0
        %319 = vmatpush1.msra.mxu0 %v285
        %320 = vmatprep.subr.mxu0 0.0
        %321 = vmatpush1.msra.mxu0 %v286
        %322 = vmatprep.subr.mxu0 0.0
        %323 = vmatpush1.msra.mxu0 %v287
        %324 = vmatprep.subr.mxu0 0.0
        %325 = vmatpush1.msra.mxu0 %v288
        %326 = vmatprep.subr.mxu0 0.0
        %327 = vmatpush1.msra.mxu0 %v289
        %328 = vmatprep.subr.mxu0 0.0
        %329 = vmatpush1.msra.mxu0 %v290
        %330 = vmatprep.subr.mxu0 0.0
        %331 = vmatpush1.msra.mxu0 0.0
        %332 = vmatprep.subr.mxu0 0.0
        %333 = vmatpush1.msra.mxu0 0.0
        %334 = vmatprep.subr.mxu0 0.0
        %335 = vmatpush1.msra.mxu0 0.0
        %336 = vmatprep.subr.mxu0 0.0
        %337 = vmatpush1.msra.mxu0 0.0
        %338 = vmatprep.subr.mxu0 0.0
        %339 = vmatpush1.msra.mxu0 0.0
        %340 = vmatprep.subr.mxu0 0.0
        %341 = vmatpush1.msra.mxu0 0.0
        %342 = vmatprep.subr.mxu0 0.0
        %343 = vmatpush1.msra.mxu0 0.0
        %344 = vmatprep.subr.mxu0 0.0
        %345 = vmatpush1.msra.mxu0 0.0
        %346 = vmatprep.subr.mxu0 0.0
        %347 = vmatpush1.msra.mxu0 0.0
        %348 = vmatprep.subr.mxu0 0.0
        %349 = vmatpush1.msra.mxu0 0.0
        %350 = vmatprep.subr.mxu0 0.0
        %351 = vmatpush1.msra.mxu0 0.0
        %352 = vmatprep.subr.mxu0 0.0
        %353 = vmatpush1.msra.mxu0 0.0
        %354 = vmatprep.subr.mxu0 0.0
        %355 = vmatpush1.msra.mxu0 0.0
        %356 = vmatprep.subr.mxu0 0.0
        %357 = vmatpush1.msra.mxu0 0.0
        %358 = vmatprep.subr.mxu0 0.0
        %359 = vmatpush1.msra.mxu0 0.0
        %360 = vmatprep.subr.mxu0 0.0
        %361 = vmatpush1.msra.mxu0 0.0
        %362 = vmatprep.mubr.f32.mxu0 0.0
        %363 = vmatmul.mubr.f32.gmra.mrb[0].mxu0 %v259
        %v364 = vpop.f32.mrb[0].mxu0
        %v365 = vadd.f32 %v296, %v364
        %v366 = vpop.f32.mrb[0].mxu0
        %367 = vmatprep.mubr.f32.mxu0 0.0
        %368 = vmatmul.mubr.f32.gmra.mrb[0].mxu0 %v260
        %v369 = vpop.f32.mrb[0].mxu0
        %v370 = vadd.f32 %v296, %v369
        %v371 = vpop.f32.mrb[0].mxu0
        %372 = vmatprep.mubr.f32.mxu0 0.0
        %373 = vmatmul.mubr.f32.gmra.mrb[0].mxu0 %v261
        %v374 = vpop.f32.mrb[0].mxu0
        %v375 = vadd.f32 %v296, %v374
        %v376 = vpop.f32.mrb[0].mxu0
        %377 = vmatprep.mubr.f32.mxu0 0.0
        %378 = vmatmul.mubr.f32.gmra.mrb[0].mxu0 %v262
        %v379 = vpop.f32.mrb[0].mxu0
        %v380 = vadd.f32 %v296, %v379
        %v381 = vpop.f32.mrb[0].mxu0
        %382 = vmatprep.mubr.f32.mxu0 0.0
        %383 = vmatmul.mubr.f32.gmra.mrb[0].mxu0 %v263
        %v384 = vpop.f32.mrb[0].mxu0
        %v385 = vadd.f32 %v296, %v384
        %v386 = vpop.f32.mrb[0].mxu0
        %387 = vmatprep.mubr.f32.mxu0 0.0
        %388 = vmatmul.mubr.f32.gmra.mrb[0].mxu0 %v264
        %v389 = vpop.f32.mrb[0].mxu0
        %v390 = vadd.f32 %v296, %v389
        %v391 = vpop.f32.mrb[0].mxu0
        %392 = vmatprep.mubr.f32.mxu0 0.0
        %393 = vmatmul.mubr.f32.gmra.mrb[0].mxu0 %v265
        %v394 = vpop.f32.mrb[0].mxu0
        %v395 = vadd.f32 %v296, %v394
        %v396 = vpop.f32.mrb[0].mxu0
        %397 = vmatprep.mubr.f32.mxu0 0.0
        %398 = vmatmul.mubr.f32.gmra.mrb[0].mxu0 %v266
        %v399 = vpop.f32.mrb[0].mxu0
        %v400 = vadd.f32 %v296, %v399
        %v401 = vpop.f32.mrb[0].mxu0
        %402 = vmatprep.mubr.f32.mxu0 0.0
        %403 = vmatmul.mubr.f32.gmra.mrb[0].mxu0 %v267
        %v404 = vpop.f32.mrb[0].mxu0
        %v405 = vadd.f32 %v296, %v404
        %v406 = vpop.f32.mrb[0].mxu0
        %407 = vmatprep.mubr.f32.mxu0 0.0
        %408 = vmatmul.mubr.f32.gmra.mrb[0].mxu0 %v268
        %v409 = vpop.f32.mrb[0].mxu0
        %v410 = vadd.f32 %v296, %v409
        %v411 = vpop.f32.mrb[0].mxu0
        %412 = vmatprep.mubr.f32.mxu0 0.0
        %413 = vmatmul.mubr.f32.gmra.mrb[0].mxu0 %v269
        %v414 = vpop.f32.mrb[0].mxu0
        %v415 = vadd.f32 %v296, %v414
        %v416 = vpop.f32.mrb[0].mxu0
        %417 = vmatprep.mubr.f32.mxu0 0.0
        %418 = vmatmul.mubr.f32.gmra.mrb[0].mxu0 %v270
        %v419 = vpop.f32.mrb[0].mxu0
        %v420 = vadd.f32 %v296, %v419
        %v421 = vpop.f32.mrb[0].mxu0
        %422 = vmatprep.mubr.f32.mxu0 0.0
        %423 = vmatmul.mubr.f32.gmra.mrb[0].mxu0 %v271
        %v424 = vpop.f32.mrb[0].mxu0
        %v425 = vadd.f32 %v296, %v424
        %v426 = vpop.f32.mrb[0].mxu0
        %427 = vmatprep.mubr.f32.mxu0 0.0
        %428 = vmatmul.mubr.f32.gmra.mrb[0].mxu0 %v272
        %v429 = vpop.f32.mrb[0].mxu0
        %v430 = vadd.f32 %v296, %v429
        %v431 = vpop.f32.mrb[0].mxu0
        %432 = vmatprep.mubr.f32.mxu0 0.0
        %433 = vmatmul.mubr.f32.gmra.mrb[0].mxu0 %v273
        %v434 = vpop.f32.mrb[0].mxu0
        %v435 = vadd.f32 %v296, %v434
        %v436 = vpop.f32.mrb[0].mxu0
        %437 = vmatprep.mubr.f32.mxu0 0.0
        %438 = vmatmul.mubr.f32.gmra.mrb[0].mxu0 %v274
        %v439 = vpop.f32.mrb[0].mxu0
        %v440 = vadd.f32 %v296, %v439
        %v441 = vpop.f32.mrb[0].mxu0
        %442 = vdwg.mxu0
        %443 = vst [vmem:[%s243] sm:$0xff] %v365
        %444 = vst [vmem:[%s243 + $0x8] sm:$0xff] %v370
        %445 = vst [vmem:[%s243 + $0x10] sm:$0xff] %v375
        %446 = vst [vmem:[%s243 + $0x18] sm:$0xff] %v380
        %447 = vst [vmem:[%s243 + $0x20] sm:$0xff] %v385
        %448 = vst [vmem:[%s243 + $0x28] sm:$0xff] %v390
        %449 = vst [vmem:[%s243 + $0x30] sm:$0xff] %v395
        %450 = vst [vmem:[%s243 + $0x38] sm:$0xff] %v400
        %451 = vst [vmem:[%s243 + $0x40] sm:$0xff] %v405
        %452 = vst [vmem:[%s243 + $0x48] sm:$0xff] %v410
        %453 = vst [vmem:[%s243 + $0x50] sm:$0xff] %v415
        %454 = vst [vmem:[%s243 + $0x58] sm:$0xff] %v420
        %455 = vst [vmem:[%s243 + $0x60] sm:$0xff] %v425
        %456 = vst [vmem:[%s243 + $0x68] sm:$0xff] %v430
        %457 = vst [vmem:[%s243 + $0x70] sm:$0xff] %v435
        %458 = vst [vmem:[%s243 + $0x78] sm:$0xff] %v440
        %v459 = vld [vmem:[%s3] sm:$0xff]
        %v460 = vld [vmem:[%s3 + $0x8] sm:$0xff]
        %v461 = vld [vmem:[%s3 + $0x10] sm:$0xff]
        %v462 = vld [vmem:[%s3 + $0x18] sm:$0xff]
        %v463 = vld [vmem:[%s3 + $0x20] sm:$0xff]
        %v464 = vld [vmem:[%s3 + $0x28] sm:$0xff]
        %v465 = vld [vmem:[%s3 + $0x30] sm:$0xff]
        %v466 = vld [vmem:[%s3 + $0x38] sm:$0xff]
        %v467 = vld [vmem:[%s3 + $0x40] sm:$0xff]
        %v468 = vld [vmem:[%s3 + $0x48] sm:$0xff]
        %v469 = vld [vmem:[%s3 + $0x50] sm:$0xff]
        %v470 = vld [vmem:[%s3 + $0x58] sm:$0xff]
        %v471 = vld [vmem:[%s3 + $0x60] sm:$0xff]
        %v472 = vld [vmem:[%s3 + $0x68] sm:$0xff]
        %v473 = vld [vmem:[%s3 + $0x70] sm:$0xff]
        %v474 = vld [vmem:[%s3 + $0x78] sm:$0xff]
        %475 = vmatprep.subr.mxu0 0.0
        %476 = vmatpush1.msra.mxu0 %v459
        %477 = vmatprep.subr.mxu0 0.0
        %478 = vmatpush1.msra.mxu0 %v460
        %479 = vmatprep.subr.mxu0 0.0
        %480 = vmatpush1.msra.mxu0 %v461
        %481 = vmatprep.subr.mxu0 0.0
        %482 = vmatpush1.msra.mxu0 %v462
        %483 = vmatprep.subr.mxu0 0.0
        %484 = vmatpush1.msra.mxu0 %v463
        %485 = vmatprep.subr.mxu0 0.0
        %486 = vmatpush1.msra.mxu0 %v464
        %487 = vmatprep.subr.mxu0 0.0
        %488 = vmatpush1.msra.mxu0 %v465
        %489 = vmatprep.subr.mxu0 0.0
        %490 = vmatpush1.msra.mxu0 %v466
        %491 = vmatprep.subr.mxu0 0.0
        %492 = vmatpush1.msra.mxu0 %v467
        %493 = vmatprep.subr.mxu0 0.0
        %494 = vmatpush1.msra.mxu0 %v468
        %495 = vmatprep.subr.mxu0 0.0
        %496 = vmatpush1.msra.mxu0 %v469
        %497 = vmatprep.subr.mxu0 0.0
        %498 = vmatpush1.msra.mxu0 %v470
        %499 = vmatprep.subr.mxu0 0.0
        %500 = vmatpush1.msra.mxu0 %v471
        %501 = vmatprep.subr.mxu0 0.0
        %502 = vmatpush1.msra.mxu0 %v472
        %503 = vmatprep.subr.mxu0 0.0
        %504 = vmatpush1.msra.mxu0 %v473
        %505 = vmatprep.subr.mxu0 0.0
        %506 = vmatpush1.msra.mxu0 %v474
        %507 = vmatprep.subr.mxu0 0.0
        %508 = vmatpush1.msra.mxu0 0.0
        %509 = vmatprep.subr.mxu0 0.0
        %510 = vmatpush1.msra.mxu0 0.0
        %511 = vmatprep.subr.mxu0 0.0
        %512 = vmatpush1.msra.mxu0 0.0
        %513 = vmatprep.subr.mxu0 0.0
        %514 = vmatpush1.msra.mxu0 0.0
        %515 = vmatprep.subr.mxu0 0.0
        %516 = vmatpush1.msra.mxu0 0.0
        %517 = vmatprep.subr.mxu0 0.0
        %518 = vmatpush1.msra.mxu0 0.0
        %519 = vmatprep.subr.mxu0 0.0
        %520 = vmatpush1.msra.mxu0 0.0
        %521 = vmatprep.subr.mxu0 0.0
        %522 = vmatpush1.msra.mxu0 0.0
        %523 = vmatprep.subr.mxu0 0.0
        %524 = vmatpush1.msra.mxu0 0.0
        %525 = vmatprep.subr.mxu0 0.0
        %526 = vmatpush1.msra.mxu0 0.0
        %527 = vmatprep.subr.mxu0 0.0
        %528 = vmatpush1.msra.mxu0 0.0
        %529 = vmatprep.subr.mxu0 0.0
        %530 = vmatpush1.msra.mxu0 0.0
        %531 = vmatprep.subr.mxu0 0.0
        %532 = vmatpush1.msra.mxu0 0.0
        %533 = vmatprep.subr.mxu0 0.0
        %534 = vmatpush1.msra.mxu0 0.0
        %535 = vmatprep.subr.mxu0 0.0
        %536 = vmatpush1.msra.mxu0 0.0
        %537 = vmatprep.subr.mxu0 0.0
        %538 = vmatpush1.msra.mxu0 0.0
        %539 = vmatprep.mubr.f32.mxu0 0.0
        %540 = vmatmul.mubr.f32.gmra.mrb[0].mxu0 %v365
        %v541 = vpop.f32.mrb[0].mxu0
        %v542 = vadd.f32 0.0, %v541
        %v543 = vpop.f32.mrb[0].mxu0
        %544 = vmatprep.mubr.f32.mxu0 0.0
        %545 = vmatmul.mubr.f32.gmra.mrb[0].mxu0 %v370
        %v546 = vpop.f32.mrb[0].mxu0
        %v547 = vadd.f32 0.0, %v546
        %v548 = vpop.f32.mrb[0].mxu0
        %549 = vmatprep.mubr.f32.mxu0 0.0
        %550 = vmatmul.mubr.f32.gmra.mrb[0].mxu0 %v375
        %v551 = vpop.f32.mrb[0].mxu0
        %v552 = vadd.f32 0.0, %v551
        %v553 = vpop.f32.mrb[0].mxu0
        %554 = vmatprep.mubr.f32.mxu0 0.0
        %555 = vmatmul.mubr.f32.gmra.mrb[0].mxu0 %v380
        %v556 = vpop.f32.mrb[0].mxu0
        %v557 = vadd.f32 0.0, %v556
        %v558 = vpop.f32.mrb[0].mxu0
        %559 = vmatprep.mubr.f32.mxu0 0.0
        %560 = vmatmul.mubr.f32.gmra.mrb[0].mxu0 %v385
        %v561 = vpop.f32.mrb[0].mxu0
        %v562 = vadd.f32 0.0, %v561
        %v563 = vpop.f32.mrb[0].mxu0
        %564 = vmatprep.mubr.f32.mxu0 0.0
        %565 = vmatmul.mubr.f32.gmra.mrb[0].mxu0 %v390
        %v566 = vpop.f32.mrb[0].mxu0
        %v567 = vadd.f32 0.0, %v566
        %v568 = vpop.f32.mrb[0].mxu0
        %569 = vmatprep.mubr.f32.mxu0 0.0
        %570 = vmatmul.mubr.f32.gmra.mrb[0].mxu0 %v395
        %v571 = vpop.f32.mrb[0].mxu0
        %v572 = vadd.f32 0.0, %v571
        %v573 = vpop.f32.mrb[0].mxu0
        %574 = vmatprep.mubr.f32.mxu0 0.0
        %575 = vmatmul.mubr.f32.gmra.mrb[0].mxu0 %v400
        %v576 = vpop.f32.mrb[0].mxu0
        %v577 = vadd.f32 0.0, %v576
        %v578 = vpop.f32.mrb[0].mxu0
        %579 = vmatprep.mubr.f32.mxu0 0.0
        %580 = vmatmul.mubr.f32.gmra.mrb[0].mxu0 %v405
        %v581 = vpop.f32.mrb[0].mxu0
        %v582 = vadd.f32 0.0, %v581
        %v583 = vpop.f32.mrb[0].mxu0
        %584 = vmatprep.mubr.f32.mxu0 0.0
        %585 = vmatmul.mubr.f32.gmra.mrb[0].mxu0 %v410
        %v586 = vpop.f32.mrb[0].mxu0
        %v587 = vadd.f32 0.0, %v586
        %v588 = vpop.f32.mrb[0].mxu0
        %589 = vmatprep.mubr.f32.mxu0 0.0
        %590 = vmatmul.mubr.f32.gmra.mrb[0].mxu0 %v415
        %v591 = vpop.f32.mrb[0].mxu0
        %v592 = vadd.f32 0.0, %v591
        %v593 = vpop.f32.mrb[0].mxu0
        %594 = vmatprep.mubr.f32.mxu0 0.0
        %595 = vmatmul.mubr.f32.gmra.mrb[0].mxu0 %v420
        %v596 = vpop.f32.mrb[0].mxu0
        %v597 = vadd.f32 0.0, %v596
        %v598 = vpop.f32.mrb[0].mxu0
        %599 = vmatprep.mubr.f32.mxu0 0.0
        %600 = vmatmul.mubr.f32.gmra.mrb[0].mxu0 %v425
        %v601 = vpop.f32.mrb[0].mxu0
        %v602 = vadd.f32 0.0, %v601
        %v603 = vpop.f32.mrb[0].mxu0
        %604 = vmatprep.mubr.f32.mxu0 0.0
        %605 = vmatmul.mubr.f32.gmra.mrb[0].mxu0 %v430
        %v606 = vpop.f32.mrb[0].mxu0
        %v607 = vadd.f32 0.0, %v606
        %v608 = vpop.f32.mrb[0].mxu0
        %609 = vmatprep.mubr.f32.mxu0 0.0
        %610 = vmatmul.mubr.f32.gmra.mrb[0].mxu0 %v435
        %v611 = vpop.f32.mrb[0].mxu0
        %v612 = vadd.f32 0.0, %v611
        %v613 = vpop.f32.mrb[0].mxu0
        %614 = vmatprep.mubr.f32.mxu0 0.0
        %615 = vmatmul.mubr.f32.gmra.mrb[0].mxu0 %v440
        %v616 = vpop.f32.mrb[0].mxu0
        %v617 = vadd.f32 0.0, %v616
        %v618 = vpop.f32.mrb[0].mxu0
        %619 = vdwg.mxu0
        %vm620 = vcmask 15360
        %621 = vst.msk [vmem:[%s257] sm:$0xff] %vm620, %v542
        %622 = vst.msk [vmem:[%s257 + $0x8] sm:$0xff] %vm620, %v547
        %623 = vst.msk [vmem:[%s257 + $0x10] sm:$0xff] %vm620, %v552
        %624 = vst.msk [vmem:[%s257 + $0x18] sm:$0xff] %vm620, %v557
        %625 = vst.msk [vmem:[%s257 + $0x20] sm:$0xff] %vm620, %v562
        %626 = vst.msk [vmem:[%s257 + $0x28] sm:$0xff] %vm620, %v567
        %627 = vst.msk [vmem:[%s257 + $0x30] sm:$0xff] %vm620, %v572
        %628 = vst.msk [vmem:[%s257 + $0x38] sm:$0xff] %vm620, %v577
        %629 = vst.msk [vmem:[%s257 + $0x40] sm:$0xff] %vm620, %v582
        %630 = vst.msk [vmem:[%s257 + $0x48] sm:$0xff] %vm620, %v587
        %631 = vst.msk [vmem:[%s257 + $0x50] sm:$0xff] %vm620, %v592
        %632 = vst.msk [vmem:[%s257 + $0x58] sm:$0xff] %vm620, %v597
        %633 = vst.msk [vmem:[%s257 + $0x60] sm:$0xff] %vm620, %v602
        %634 = vst.msk [vmem:[%s257 + $0x68] sm:$0xff] %vm620, %v607
        %635 = vst.msk [vmem:[%s257 + $0x70] sm:$0xff] %vm620, %v612
        %636 = vst.msk [vmem:[%s257 + $0x78] sm:$0xff] %vm620, %v617
        %s637 = sand.u32 %s120, 1
        %s638 = scalar_lea.sflag [#allocation4], %s637
        %s639 = sand.u32 %s120, 1
        %s640 = smul.addr %s639, 128
        %s641 = scalar_lea.vmem [#allocation5], %s640
        %s642 = smul.u32 16, %s23
        %p643 = scmp.lt.s32.totalorder %s642, 47
        %s644 = scalar_select %p643, %s642, 47
        %s645 = smul.addr %s644, 8
        %s646 = scalar_lea.vmem %s5, %s645
        // Predicated region
        $region41: #{tpu_custom_call.1} parent=35 // pred_check
          %p647 = pneg %p130
        $region42: #{tpu_custom_call.1} parent=35 // pred_check_branch
          %649 = sbr.rel (%p647) target = $region44
        $region43: #{tpu_custom_call.1} parent=35 // pred_region
          %s650 = smul.u32 16, %s23
          %s652 = ssub.s32 2048, 2048
          %653 = vsyncadd %s638, %s652
          %s654 = smul.addr %s650, 128
          %s655 = scalar_lea.hbm %s4, %s654
          %s656 = sshll.u32 %s641, 4
          %s657 = int_to_ptr.vmem [resolvable:$true] %s656
          %662 = dma.vmem_to_hbm [thread:$0]  %s657, 2048, %s655, %s638, 128, 128, 8
        $region44: #{tpu_custom_call.1} parent=35 // pred_fallthru
          _
        // Predicated region
        $region45: #{tpu_custom_call.1} parent=35 // pred_check
          %p663 = pneg %p156
        $region46: #{tpu_custom_call.1} parent=35 // pred_check_branch
          %665 = sbr.rel (%p663) target = $region48
        $region47: #{tpu_custom_call.1} parent=35 // pred_region
          %s666 = smul.u32 16, %s23
        $region48: #{tpu_custom_call.1} parent=35 // pred_fallthru
          _
      $region36: #{tpu_custom_call.1} parent=5 // pred_fallthru
        _
      %p667 = scmp.le.s32.totalorder 2, %s18
      // Predicated region
      $region49: #{tpu_custom_call.1} parent=5 // pred_check
        %p668 = pneg %p667
      $region50: #{tpu_custom_call.1} parent=5 // pred_check_branch
        %670 = sbr.rel (%p668) target = $region52
      $region51: #{tpu_custom_call.1} parent=5 // pred_region
        %s671 = ssub.s32 %s18, 2
        // Predicated region
        $region53: #{tpu_custom_call.1} parent=51 // pred_check
          %p672 = pneg %p136
        $region54: #{tpu_custom_call.1} parent=51 // pred_check_branch
          %674 = sbr.rel (%p672) target = $region56
        $region55: #{tpu_custom_call.1} parent=51 // pred_region
          %s675 = sand.u32 %s121, 1
          %s676 = scalar_lea.sflag [#allocation4], %s675
          %s677 = sand.u32 %s121, 1
          %s678 = smul.addr %s677, 128
          %s679 = scalar_lea.vmem [#allocation5], %s678
          %680 = dma.done %s676, 2048
        $region56: #{tpu_custom_call.1} parent=51 // pred_fallthru
          _
        // Predicated region
        $region57: #{tpu_custom_call.1} parent=51 // pred_check
          %p681 = pneg %p162
        $region58: #{tpu_custom_call.1} parent=51 // pred_check_branch
          %683 = sbr.rel (%p681) target = $region60
        $region59: #{tpu_custom_call.1} parent=51 // pred_region
          %s684 = smul.u32 16, %s24
          %p685 = scmp.lt.s32.totalorder %s684, 47
          %s686 = scalar_select %p685, %s684, 47
          %s687 = smul.addr %s686, 8
          %s688 = scalar_lea.vmem %s5, %s687
        $region60: #{tpu_custom_call.1} parent=51 // pred_fallthru
          _
      $region52: #{tpu_custom_call.1} parent=5 // pred_fallthru
        _
    $region6: #{tpu_custom_call.1} parent=1 // loop_footer
      %s22 = sadd.s32 1, %s18
    $region7: #{tpu_custom_call.1} parent=1 // loop_footer_branch
      %17 = sbr.rel target = $region3
    $region8: #{tpu_custom_call.1} parent=1 // loop_exit
      _
    %689 = vsyncpa [#allocation3], 1
    %s690 = scalar_lea.sflag [#allocation3], 1
    %691 = vsyncpa %s690, 1
    %692 = vsyncpa [#allocation4], 1
    %s693 = scalar_lea.sflag [#allocation4], 1
    %694 = vsyncpa %s693, 1

</llo_original>
